<compile_context>
chip_gen: v5e
topology: v5e:2x2
jax: 0.10.0
libtpu: 0.0.40
codegen_flags: <defaults>
</compile_context>

<pallas_src>
import jax
import jax.numpy as jnp
from jax.experimental import pallas as pl
from jax.experimental.pallas import tpu as pltpu

_LANE = 128
_MAX_TILE = 1024        # atoms per grid step (multiple of 128)
_SIGMA = 1.0            # LES default charge-smearing width
_KE = 14.399645         # e^2 / (4*pi*eps0) in eV * Angstrom
_NMAX = 2               # reciprocal-space grid half-width
_NK_PAD = 128           # (2*_NMAX+1)^3 = 125 k-vectors, padded to a full lane width


# ----------------------------------------------------------------------------- kernels
def _scatter_sum_kernel(e_ref, b_ref, out_ref, sr_acc):
    """Per-molecule sum of per-atom energies (scatter reduce='sum'), atom-tiled."""
    pid = pl.program_id(0)

    @pl.when(pid == 0)
    def _init():
        sr_acc[...] = jnp.zeros_like(sr_acc)

    b_sub = sr_acc.shape[0]
    n_t = e_ref.shape[1]
    member = (jax.lax.broadcasted_iota(jnp.int32, (b_sub, n_t), 0)
              == b_ref[...]).astype(jnp.float32)                         # (B_pad, NT)
    sr_acc[...] += jnp.sum(member * e_ref[...], axis=1, keepdims=True)   # (B_pad, 1)

    @pl.when(pid == pl.num_programs(0) - 1)
    def _finalize():
        out_ref[...] = jnp.broadcast_to(sr_acc[...], out_ref.shape)


def _fused_energy_kernel(e_ref, b_ref, q_ref, frac_ref, nvec_ref, coef_ref,
                         out_ref, sc_acc, ss_acc, sr_acc):
    """energy_sr (scatter-sum) + E_lr (latent-charge Ewald reciprocal-space sum)."""
    pid = pl.program_id(0)

    @pl.when(pid == 0)
    def _init():
        sc_acc[...] = jnp.zeros_like(sc_acc)
        ss_acc[...] = jnp.zeros_like(ss_acc)
        sr_acc[...] = jnp.zeros_like(sr_acc)

    b_sub, _ = sc_acc.shape
    n_t = e_ref.shape[1]

    member = (jax.lax.broadcasted_iota(jnp.int32, (b_sub, n_t), 0)
              == b_ref[...]).astype(jnp.float32)                         # (B_pad, NT)
    qm = member * q_ref[...]                                             # (B_pad, NT)

    # Short-range scatter-sum (1/NK of the long-range work; lane reduce is fine here).
    sr_acc[...] += jnp.sum(member * e_ref[...], axis=1, keepdims=True)   # (B_pad, 1)

    # phase computed ONCE per (k, atom): nvec (NK,3) . frac (3, NT).  The K=3
    # contraction is three broadcast multiply-adds on the VPU (negligible next to the
    # cos/sin EUP cost; avoids an awkward K=3 MXU shape).
    nv = nvec_ref[...]                                                   # (NK, 3)
    fr = frac_ref[...]                                                   # (3, NT)
    phase = (nv[:, 0:1] * fr[0:1, :]
             + nv[:, 1:2] * fr[1:2, :]
             + nv[:, 2:3] * fr[2:3, :])                                  # (NK, NT)
    cosp = jnp.cos(phase)
    sinp = jnp.sin(phase)

    # Structure factors: contraction over atoms (lane axis of both operands) -> MXU.
    dn = (((1,), (1,)), ((), ()))
    sc_acc[...] += jax.lax.dot_general(qm, cosp, dn,
                                       preferred_element_type=jnp.float32)  # (B_pad, NK)
    ss_acc[...] += jax.lax.dot_general(qm, sinp, dn,
                                       preferred_element_type=jnp.float32)  # (B_pad, NK)

    @pl.when(pid == pl.num_programs(0) - 1)
    def _finalize():
        e_lr = jnp.sum(coef_ref[...] * (sc_acc[...] * sc_acc[...]
                                        + ss_acc[...] * ss_acc[...]),
                       axis=1, keepdims=True)                            # (B_pad, 1)
        out_ref[...] = jnp.broadcast_to(sr_acc[...] + e_lr, out_ref.shape)


# ----------------------------------------------------------------------------- glue
def _round_up(x, m):
    return ((x + m - 1) // m) * m


def _recip_vectors(cell):
    """2*pi * reciprocal lattice vectors (rows), per structure: (B, 3, 3)."""
    return 2.0 * jnp.pi * jnp.swapaxes(jnp.linalg.inv(cell.astype(jnp.float32)), 1, 2)


def _k_grid():
    """Integer k-grid (NK_PAD, 3); padded rows are zero (k = 0, coef = 0)."""
    r = jnp.arange(-_NMAX, _NMAX + 1)
    n1, n2, n3 = jnp.meshgrid(r, r, r, indexing="ij")
    nvec = jnp.stack([n1.ravel(), n2.ravel(), n3.ravel()], axis=1).astype(jnp.float32)
    return jnp.pad(nvec, ((0, _NK_PAD - nvec.shape[0]), (0, 0)))


def _k_coefficients(nvec, recip, cell):
    """Per-structure k-vectors and reciprocal-space coefficients."""
    kvec = jnp.einsum("ke,bed->bkd", nvec, recip)                        # (B, NK, 3)
    k2 = jnp.sum(kvec * kvec, axis=-1)                                   # (B, NK)
    vol = jnp.abs(jnp.linalg.det(cell.astype(jnp.float32)))              # (B,)
    pref = _KE * 2.0 * jnp.pi / vol
    safe_k2 = jnp.where(k2 > 1e-8, k2, 1.0)
    coef = jnp.where(k2 > 1e-8,
                     pref[:, None] * jnp.exp(-0.5 * _SIGMA * _SIGMA * k2) / safe_k2,
                     0.0)
    return kvec, coef


def energy_aggregate(energy, batch, n_mol, pos=None, cell=None, charge=None):
    """Pallas implementation of EnergyAggregator.forward.

    energy: (N, 1) per-atom energies; batch: (N,) int molecule index (must be >= 0);
    n_mol: number of molecules.  If `charge` (with pos, cell) is given the long-range
    LES Ewald energy is added.  Returns a (n_mol,) float32 vector.
    """
    n_atoms = energy.shape[0]
    n_tile = min(_MAX_TILE, max(_LANE, _round_up(n_atoms, _LANE)))
    n_pad = _round_up(max(n_atoms, n_tile), n_tile)
    n_tiles = n_pad // n_tile
    b_sub = max(8, _round_up(n_mol, 8))

    # Per-atom rows, atoms on the 128-lane axis.  Padded atoms get batch = -1 so they
    # never match a molecule row (real batch ids must be >= 0).
    e = jnp.zeros((1, n_pad), jnp.float32).at[0, :n_atoms].set(
        energy.reshape(-1).astype(jnp.float32))
    b = jnp.full((1, n_pad), -1, jnp.int32).at[0, :n_atoms].set(batch.astype(jnp.int32))

    cparams = pltpu.CompilerParams(dimension_semantics=("arbitrary",),
                                   vmem_limit_bytes=32 * 1024 * 1024)

    if charge is None:
        out = pl.pallas_call(
            _scatter_sum_kernel,
            grid=(n_tiles,),
            in_specs=[pl.BlockSpec((1, n_tile), lambda i: (0, i)),
                      pl.BlockSpec((1, n_tile), lambda i: (0, i))],
            out_specs=pl.BlockSpec((b_sub, _LANE), lambda i: (0, 0)),
            out_shape=jax.ShapeDtypeStruct((b_sub, _LANE), jnp.float32),
            scratch_shapes=[pltpu.VMEM((b_sub, 1), jnp.float32)],
            compiler_params=cparams,
        )(e, b)
        return out[:n_mol, 0]

    # --- charge branch: scatter-sum + latent-charge Ewald reciprocal-space energy ---
    recip = _recip_vectors(cell)                                         # (B, 3, 3)
    nvec = _k_grid()                                                     # (NK, 3)
    _, coef = _k_coefficients(nvec, recip, cell)                         # (B, NK)
    coef = jnp.zeros((b_sub, _NK_PAD), jnp.float32).at[:n_mol].set(coef)

    # Per-atom 2*pi-scaled fractional coordinates: frac[:, n] = recip[batch[n]] @ pos[n]
    # so phase[k, n] = nvec[k] . frac[:, n] = kvec[batch[n], k] . pos[n].
    frac = jnp.einsum("ned,nd->ne", recip[batch], pos.astype(jnp.float32))   # (N, 3)
    fracT = jnp.zeros((3, n_pad), jnp.float32).at[:, :n_atoms].set(frac.T)
    q = jnp.zeros((1, n_pad), jnp.float32).at[0, :n_atoms].set(
        charge.reshape(-1).astype(jnp.float32))

    out = pl.pallas_call(
        _fused_energy_kernel,
        grid=(n_tiles,),
        in_specs=[pl.BlockSpec((1, n_tile), lambda i: (0, i)),        # per-atom energy
                  pl.BlockSpec((1, n_tile), lambda i: (0, i)),        # batch id
                  pl.BlockSpec((1, n_tile), lambda i: (0, i)),        # latent charge
                  pl.BlockSpec((3, n_tile), lambda i: (0, i)),        # 2*pi frac coords
                  pl.BlockSpec((_NK_PAD, 3), lambda i: (0, 0)),       # k-grid (shared)
                  pl.BlockSpec((b_sub, _NK_PAD), lambda i: (0, 0))],  # k coefficients
        out_specs=pl.BlockSpec((b_sub, _LANE), lambda i: (0, 0)),
        out_shape=jax.ShapeDtypeStruct((b_sub, _LANE), jnp.float32),
        scratch_shapes=[pltpu.VMEM((b_sub, _NK_PAD), jnp.float32),    # sum q*cos
                        pltpu.VMEM((b_sub, _NK_PAD), jnp.float32),    # sum q*sin
                        pltpu.VMEM((b_sub, 1), jnp.float32)],         # short-range sum
        compiler_params=cparams,
    )(e, b, q, fracT, nvec, coef)
    return out[:n_mol, 0]


# ----------------------------------------------------------------------------- demo
if __name__ == "__main__":
    key = jax.random.PRNGKey(0)
    N, B = 20, 3
    batch = jnp.array([0] * 7 + [1] * 6 + [2] * 7, dtype=jnp.int32)
    k1, k2, k3, k4 = jax.random.split(key, 4)
    energy = jax.random.normal(k1, (N, 1), dtype=jnp.float32)
    pos = jax.random.uniform(k2, (N, 3), dtype=jnp.float32, minval=0.0, maxval=6.0)
    charge = jax.random.normal(k3, (N,), dtype=jnp.float32)          # latent charges
    cell = (jnp.tile(jnp.eye(3, dtype=jnp.float32)[None] * 6.0, (B, 1, 1))
            + 0.05 * jax.random.normal(k4, (B, 3, 3), dtype=jnp.float32))

    # Branch without `charge` attribute: plain scatter-sum.
    e_nocharge = energy_aggregate(energy, batch, B)
    # Branch with `charge`: scatter-sum + LES long-range energy.
    # TODO(synk): exact constants / dynamic k-cutoff of the external `les` package are
    # not available; a standard latent-charge Ewald reciprocal sum is used for E_lr.
    e_charge = energy_aggregate(energy, batch, B, pos=pos, cell=cell, charge=charge)
    jax.block_until_ready((e_nocharge, e_charge))

    # ---- pure-JAX reference (same math) ------------------------------------
    onehot = (jnp.arange(B)[:, None] == batch[None, :]).astype(jnp.float32)
    ref_sr = onehot @ energy.reshape(-1)
    recip = _recip_vectors(cell)
    nvec = _k_grid()
    kvec, coef = _k_coefficients(nvec, recip, cell)
    phase = jnp.einsum("bkd,nd->bkn", kvec, pos)
    qm = onehot * charge[None, :]
    sc = jnp.einsum("bn,bkn->bk", qm, jnp.cos(phase))
    ss = jnp.einsum("bn,bkn->bk", qm, jnp.sin(phase))
    ref_lr = jnp.sum(coef * (sc * sc + ss * ss), axis=1)

    assert e_nocharge.shape == (B,) and e_charge.shape == (B,)
    assert jnp.allclose(e_nocharge, ref_sr, rtol=1e-3, atol=1e-3)
    assert jnp.allclose(e_charge, ref_sr + ref_lr, rtol=1e-3, atol=2e-2)
    print("KERNEL_OK")
</pallas_src>

<mosaic_0001>
module attributes {stable_mosaic.version = 11 : i64} {
  func.func @_scatter_sum_kernel(%arg0: i32, %arg1: memref<1x128xf32, #tpu.memory_space<vmem>>, %arg2: memref<1x128xi32, #tpu.memory_space<vmem>>, %arg3: memref<8x128xf32, #tpu.memory_space<vmem>>, %arg4: memref<8x1xf32, #tpu.memory_space<vmem>>) attributes {dimension_semantics = [#tpu.dimension_semantics<arbitrary>], iteration_bounds = array<i64: 1>, scalar_prefetch = 0 : i64, scratch_operands = 1 : i64, tpu.core_type = #tpu.core_type<tc>, window_params = [{transform_indices = @transform_0, window_bounds = array<i64: 1, 128>}, {transform_indices = @transform_1, window_bounds = array<i64: 1, 128>}, {pipeline_mode = #tpu.pipeline_mode<synchronous>, transform_indices = @transform_2, window_bounds = array<i64: 8, 128>}]} {
    %c0_i32 = arith.constant 0 : i32
    %0 = arith.cmpi eq, %arg0, %c0_i32 : i32
    %1 = arith.extui %0 : i1 to i32
    %c0_i32_0 = arith.constant 0 : i32
    %2 = arith.cmpi ne, %1, %c0_i32_0 : i32
    scf.if %2 {
      %cst_10 = arith.constant 0.000000e+00 : f32
      %20 = vector.broadcast %cst_10 : f32 to vector<8x1xf32>
      %c0_11 = arith.constant 0 : index
      %c0_12 = arith.constant 0 : index
      %21 = vector.load %arg4[%c0_11, %c0_12] : memref<8x1xf32, #tpu.memory_space<vmem>>, vector<8x1xf32>
      tpu.vector_store %arg4[%c0_11, %c0_12], %20 {strides = array<i32>} : memref<8x1xf32, #tpu.memory_space<vmem>>, vector<8x1xf32>,
    } else {
    }
    %3 = tpu.iota {dimensions = array<i32: 0>} : vector<8x128xi32>
    %c0 = arith.constant 0 : index
    %c0_1 = arith.constant 0 : index
    %4 = vector.load %arg2[%c0, %c0_1] : memref<1x128xi32, #tpu.memory_space<vmem>>, vector<1x128xi32>
    %5 = vector.broadcast %4 : vector<1x128xi32> to vector<8x128xi32>
    %6 = arith.cmpi eq, %3, %5 : vector<8x128xi32>
    %7 = arith.extui %6 : vector<8x128xi1> to vector<8x128xi32>
    %8 = arith.sitofp %7 : vector<8x128xi32> to vector<8x128xf32>
    %c0_2 = arith.constant 0 : index
    %c0_3 = arith.constant 0 : index
    %9 = vector.load %arg4[%c0_2, %c0_3] : memref<8x1xf32, #tpu.memory_space<vmem>>, vector<8x1xf32>
    %c0_4 = arith.constant 0 : index
    %c0_5 = arith.constant 0 : index
    %10 = vector.load %arg1[%c0_4, %c0_5] : memref<1x128xf32, #tpu.memory_space<vmem>>, vector<1x128xf32>
    %11 = vector.broadcast %10 : vector<1x128xf32> to vector<8x128xf32>
    %12 = arith.mulf %8, %11 : vector<8x128xf32>
    %cst = arith.constant dense<0.000000e+00> : vector<8xf32>
    %13 = vector.multi_reduction <add>, %12, %cst [1] : vector<8x128xf32> to vector<8xf32>
    %14 = vector.shape_cast %13 : vector<8xf32> to vector<8x1xf32>
    %15 = arith.addf %9, %14 : vector<8x1xf32>
    %c0_6 = arith.constant 0 : index
    %c0_7 = arith.constant 0 : index
    %16 = vector.load %arg4[%c0_6, %c0_7] : memref<8x1xf32, #tpu.memory_space<vmem>>, vector<8x1xf32>
    tpu.vector_store %arg4[%c0_6, %c0_7], %15 {strides = array<i32>} : memref<8x1xf32, #tpu.memory_space<vmem>>, vector<8x1xf32>,
    %c0_i32_8 = arith.constant 0 : i32
    %17 = arith.cmpi eq, %arg0, %c0_i32_8 : i32
    %18 = arith.extui %17 : i1 to i32
    %c0_i32_9 = arith.constant 0 : i32
    %19 = arith.cmpi ne, %18, %c0_i32_9 : i32
    scf.if %19 {
      %c0_10 = arith.constant 0 : index
      %c0_11 = arith.constant 0 : index
      %20 = vector.load %arg4[%c0_10, %c0_11] : memref<8x1xf32, #tpu.memory_space<vmem>>, vector<8x1xf32>
      %21 = vector.shape_cast %20 : vector<8x1xf32> to vector<8x1xf32>
      %22 = vector.broadcast %21 : vector<8x1xf32> to vector<8x128xf32>
      %c0_12 = arith.constant 0 : index
      %c0_13 = arith.constant 0 : index
      %23 = vector.load %arg3[%c0_12, %c0_13] : memref<8x128xf32, #tpu.memory_space<vmem>>, vector<8x128xf32>
      tpu.vector_store %arg3[%c0_12, %c0_13], %22 {strides = array<i32>} : memref<8x128xf32, #tpu.memory_space<vmem>>, vector<8x128xf32>,
    } else {
    }
    return
  }
  func.func @transform_0(%arg0: i32) -> (i32, i32) {
    %c0_i32 = arith.constant 0 : i32
    %c0_i32_0 = arith.constant 0 : i32
    return %c0_i32, %arg0 : i32, i32
  }
  func.func @transform_1(%arg0: i32) -> (i32, i32) {
    %c0_i32 = arith.constant 0 : i32
    %c0_i32_0 = arith.constant 0 : i32
    return %c0_i32, %arg0 : i32, i32
  }
  func.func @transform_2(%arg0: i32) -> (i32, i32) {
    %c0_i32 = arith.constant 0 : i32
    %c0_i32_0 = arith.constant 0 : i32
    %c0_i32_1 = arith.constant 0 : i32
    return %c0_i32, %c0_i32_0 : i32, i32
  }
}

</mosaic_0001>

<llo_original>
// kernel: tpu_custom_call.1
$region0: #{tpu_custom_call.1}
  #allocation0 [shape = 'u32[]', space=smem, size = 0x4, offset = 0x4, fixed_abs, tag = 'smem constant byte address 0x4 - core index']
  #allocation1 [shape = 'u32[72,128]{1,0:T(1,128)}', space=vmem, size = 0x9000, scoped, tag = 'internal scratch']
  #allocation2 [shape = 'f32[8,1]{1,0:T(8,128)}', space=vmem, size = 0x1000, scoped, tag = 'scratch operand']
  %s0 = inlined_call_operand.hbm [shape: f32[1,128], index: 0, kind: input, shape index: {}]
  %s1 = inlined_call_operand.hbm [shape: s32[1,128], index: 1, kind: input, shape index: {}]
  %s2 = inlined_call_operand.hbm [shape: f32[8,128], index: 2, kind: output, shape index: {}]
  %s3 = sld [smem:[#allocation0]]
  $region34: #{tpu_custom_call.1} parent=0
    _
  %s5 = ssub.s32 1, %s3
  %s6 = scalar_select 0, %s5, %s3
  $region1: #{tpu_custom_call.1} parent=0
    #allocation3 [shape = 'u8[512]{0}', space=vmem, size = 0x400, scoped, tag = 'input window, operand 0, single buffered']
    #allocation4 [shape = 's32[1]{0}', space=sflag, size = 0x4, scoped, tag = 'scoped memory for tpu_custom_call.1']
    #allocation5 [shape = 's32[1]{0}', space=sflag, size = 0x4, scoped, tag = 'scoped memory for tpu_custom_call.1']
    #allocation6 [shape = 'u8[512]{0}', space=vmem, size = 0x400, scoped, tag = 'input window, operand 1, single buffered']
    #allocation7 [shape = 's32[1]{0}', space=sflag, size = 0x4, scoped, tag = 'scoped memory for tpu_custom_call.1']
    #allocation8 [shape = 'u8[4096]{0}', space=vmem, size = 0x1000, scoped, tag = 'output window, operand 0, single buffered']
    %7 = vsyncpa [#allocation4], 0
    %8 = vsyncpa [#allocation7], 0
    %9 = vsyncpa [#allocation5], 0
    // Predicated region
    $region2: #{tpu_custom_call.1} parent=1 // pred_check
      _
    $region3: #{tpu_custom_call.1} parent=1 // pred_check_branch
      %11 = sbr.rel (0) target = $region5
    $region4: #{tpu_custom_call.1} parent=1 // pred_region
      %13 = vsyncadd [#allocation4], 0
      %s15 = sshll.u32 %s0, 4
      %s16 = int_to_ptr.hbm [resolvable:$true] %s15
      %s17 = sshll.u32 [#allocation3], 4
      %s18 = int_to_ptr.vmem [resolvable:$true] %s17
      %20 = dma.hbm_to_vmem [thread:$0]  %s16, 16, %s18, [#allocation4]
    $region5: #{tpu_custom_call.1} parent=1 // pred_fallthru
      _
    // Predicated region
    $region6: #{tpu_custom_call.1} parent=1 // pred_check
      _
    $region7: #{tpu_custom_call.1} parent=1 // pred_check_branch
      %22 = sbr.rel (0) target = $region9
    $region8: #{tpu_custom_call.1} parent=1 // pred_region
      %24 = vsyncadd [#allocation7], 0
      %s26 = sshll.u32 %s1, 4
      %s27 = int_to_ptr.hbm [resolvable:$true] %s26
      %s28 = sshll.u32 [#allocation6], 4
      %s29 = int_to_ptr.vmem [resolvable:$true] %s28
      %31 = dma.hbm_to_vmem [thread:$0]  %s27, 16, %s29, [#allocation7]
    $region9: #{tpu_custom_call.1} parent=1 // pred_fallthru
      _
    // Predicated region
    $region10: #{tpu_custom_call.1} parent=1 // pred_check
      _
    $region11: #{tpu_custom_call.1} parent=1 // pred_check_branch
      %33 = sbr.rel (0) target = $region13
    $region12: #{tpu_custom_call.1} parent=1 // pred_region
      %35 = dma.done [#allocation4], 16
    $region13: #{tpu_custom_call.1} parent=1 // pred_fallthru
      _
    // Predicated region
    $region14: #{tpu_custom_call.1} parent=1 // pred_check
      _
    $region15: #{tpu_custom_call.1} parent=1 // pred_check_branch
      %37 = sbr.rel (0) target = $region17
    $region16: #{tpu_custom_call.1} parent=1 // pred_region
      %39 = dma.done [#allocation7], 16
    $region17: #{tpu_custom_call.1} parent=1 // pred_fallthru
      _
    %p40 = scmp.eq.s32.totalorder 0, 0
    // Predicated region
    $region18: #{tpu_custom_call.1} parent=1 // pred_check
      %p41 = pneg %p40
    $region19: #{tpu_custom_call.1} parent=1 // pred_check_branch
      %43 = sbr.rel (%p41) target = $region21
    $region20: #{tpu_custom_call.1} parent=1 // pred_region
      %vm44 = vcmask 7168
      %45 = vst.msk [vmem:[#allocation2] sm:$0xff] %vm44, 0.0
    $region21: #{tpu_custom_call.1} parent=1 // pred_fallthru
      _
    %v46 = vlaneseq
    %v47 = vshrl.u32 %v46, 7
    %v48 = vld [vmem:[#allocation6] sm:$0x1]
    %v49 = vperm.slane %v48, 0
    %vm50 = vcmp.eq.s32.totalorder %v47, %v49
    %v51 = vsel %vm50, 1, 0
    %v52 = vcvt.s32.f32 %v51
    %v53 = vld [vmem:[#allocation2] sm:$0xff]
    %v54 = vld [vmem:[#allocation3] sm:$0x1]
    %v56 = vperm.slane %v54, 0
    %v58 = vmul.f32 %v52, %v56
    %59 = vadd.xlane.f32.xlu0 %v58
    %v60 = vpop.xlane.xlu0 %59
    %v61 = vadd.f32 %v53, %v60
    %vm62 = vcmask 7168
    %63 = vst.msk [vmem:[#allocation2] sm:$0xff] %vm62, %v61
    // Predicated region
    $region22: #{tpu_custom_call.1} parent=1 // pred_check
      %p64 = pneg %p40
    $region23: #{tpu_custom_call.1} parent=1 // pred_check_branch
      %66 = sbr.rel (%p64) target = $region25
    $region24: #{tpu_custom_call.1} parent=1 // pred_region
      %v67 = vld [vmem:[#allocation2] sm:$0xff]
      %69 = vset.pattern.permute.xlu0 0
      %70 = vperm.xlu0 %69, %v67
      %v71 = vpop.permute.xlu0 %70
      %73 = vst [vmem:[#allocation8] sm:$0xff] %v71
    $region25: #{tpu_custom_call.1} parent=1 // pred_fallthru
      _
    // Predicated region
    $region26: #{tpu_custom_call.1} parent=1 // pred_check
      _
    $region27: #{tpu_custom_call.1} parent=1 // pred_check_branch
      %75 = sbr.rel (0) target = $region29
    $region28: #{tpu_custom_call.1} parent=1 // pred_region
      %77 = vsyncadd [#allocation5], 0
      %s79 = sshll.u32 [#allocation8], 4
      %s80 = int_to_ptr.vmem [resolvable:$true] %s79
      %s81 = sshll.u32 %s2, 4
      %s82 = int_to_ptr.hbm [resolvable:$true] %s81
      %84 = dma.vmem_to_hbm [thread:$0]  %s80, 128, %s82, [#allocation5]
    $region29: #{tpu_custom_call.1} parent=1 // pred_fallthru
      _
    // Predicated region
    $region30: #{tpu_custom_call.1} parent=1 // pred_check
      _
    $region31: #{tpu_custom_call.1} parent=1 // pred_check_branch
      %86 = sbr.rel (0) target = $region33
    $region32: #{tpu_custom_call.1} parent=1 // pred_region
      %88 = dma.done [#allocation5], 128
    $region33: #{tpu_custom_call.1} parent=1 // pred_fallthru
      _
    %89 = vsyncpa [#allocation4], 1
    %90 = vsyncpa [#allocation7], 1
    %91 = vsyncpa [#allocation5], 1

</llo_original>
